<compile_context>
chip_gen: v6e
topology: v6e:2x2x1
jax: 0.10.0
libtpu: 0.0.40
codegen_flags: <defaults>
</compile_context>

<pallas_src>
import math

import jax
import jax.numpy as jnp
from jax import lax
from jax.experimental import pallas as pl
from jax.experimental.pallas import tpu as pltpu  # noqa: F401

# ---- problem sizes (small, consistent with the module) ----
BATCH = 2
SEQ = 8
HID_DIM = 32
N_HEADS = 4
HEAD_DIM = HID_DIM // N_HEADS
BS = BATCH * SEQ            # 16  : batch folded into rows (sublanes)
R = N_HEADS * BS            # 64  : (head, batch, seq) folded into rows
INV_SCALE = 1.0 / math.sqrt(HEAD_DIM)
NEG_INF = -1e30


def mha_kernel(xin_ref, wqkv_ref, bqkv_ref, wo_ref, bo_ref,
               hmask_ref, amask_ref, x_ref, alpha_ref):
    # ---- fused Q/K/V projection: one (48,32)@(32,96) MXU push ----
    p = jnp.dot(xin_ref[...], wqkv_ref[...],
                preferred_element_type=jnp.float32) + bqkv_ref[...]      # (48,96)
    q = p[0:BS, 0:HID_DIM]                                  # (16,32) query@Wq+bq
    k = p[BS:2 * BS, HID_DIM:2 * HID_DIM]                   # (16,32) key  @Wk+bk
    v = p[2 * BS:3 * BS, 2 * HID_DIM:3 * HID_DIM]           # (16,32) value@Wv+bv

    # ---- replicate K/V per head and zero the other heads' columns ----
    hm = hmask_ref[...]                                     # (64,32) 0/1 mask
    kbig = jnp.concatenate([k] * N_HEADS, axis=0) * hm      # (64,32) row=(h,b,t)
    vbig = jnp.concatenate([v] * N_HEADS, axis=0) * hm      # (64,32)

    # ---- all (batch,head) scores with a single MXU push: (16,32)·(64,32)^T ----
    s = lax.dot_general(q, kbig, (((1,), (1,)), ((), ())),
                        preferred_element_type=jnp.float32) * INV_SCALE  # (16,64)
    # rows replicated per head; block-diagonal additive mask keeps only the
    # matching (head, batch) key block per row.
    s = jnp.concatenate([s] * N_HEADS, axis=0) + amask_ref[...]          # (64,64)

    # ---- row softmax (exact per-(batch,head) thanks to the -1e30 mask) ----
    m = jnp.max(s, axis=-1, keepdims=True)
    e = jnp.exp(s - m)
    denom = jnp.sum(e, axis=-1, keepdims=True)
    alpha = e * pl.reciprocal(denom)                        # exact reciprocal
    alpha_ref[...] = alpha                                  # one lane-dense store

    # TODO(synk): training-mode dropout on alpha not implemented (eval identity).

    # ---- PV: one (64,64)@(64,32) push; head h writes only its own columns ----
    ctx_big = jnp.dot(alpha, vbig, preferred_element_type=jnp.float32)   # (64,32)
    ctx = ctx_big[0:BS, :]
    for h in range(1, N_HEADS):                             # disjoint columns ->
        ctx = ctx + ctx_big[h * BS:(h + 1) * BS, :]         # sum == concat heads

    # ---- output projection ----
    x_ref[...] = jnp.dot(ctx, wo_ref[...],
                         preferred_element_type=jnp.float32) + bo_ref[...]


@jax.jit
def multi_head_attention(query, key, value, params):
    """query/key/value: (B, S, D) f32. params: dict of weights/biases."""
    B, S, D = query.shape
    H, Dh = N_HEADS, HEAD_DIM
    bs = B * S
    r = H * bs

    # Row-stack the three inputs and column-stack the three projection weights
    # so the kernel does a single fused projection matmul.
    x_stack = jnp.concatenate([query.reshape(bs, D),
                               key.reshape(bs, D),
                               value.reshape(bs, D)], axis=0)            # (48,32)
    w_qkv = jnp.concatenate([params["wq"], params["wk"], params["wv"]], axis=1)
    b_qkv = jnp.concatenate([params["bq"], params["bk"], params["bv"]], axis=1)

    # head column mask: row block h keeps only columns of head h
    col_head = jnp.arange(D) // Dh                                       # (32,)
    row_head = jnp.arange(r) // bs                                       # (64,)
    head_mask = (row_head[:, None] == col_head[None, :]).astype(jnp.float32)

    # additive attention mask: rows/cols grouped by (head, batch) in blocks of S
    grp = jnp.arange(r) // S
    attn_mask = jnp.where(grp[:, None] == grp[None, :],
                          0.0, NEG_INF).astype(jnp.float32)              # (64,64)

    x2d, alpha_big = pl.pallas_call(
        mha_kernel,
        out_shape=(
            jax.ShapeDtypeStruct((bs, D), jnp.float32),
            jax.ShapeDtypeStruct((r, r), jnp.float32),
        ),
    )(x_stack, w_qkv, b_qkv, params["wo"], params["bo"], head_mask, attn_mask)

    x = x2d.reshape(B, S, D)

    # unpack the fused (64,64) alpha block into (B, H, S, S)
    a4 = alpha_big.reshape(H * B, S, H * B, S)
    g = jnp.arange(H * B)
    alpha = a4[g, :, g, :]                       # (H*B, S, S) diagonal blocks
    alpha = alpha.reshape(H, B, S, S).transpose(1, 0, 2, 3)
    return x, alpha


def reference_mha(query, key, value, params):
    """Pure-JAX reference mirroring the PyTorch forward (eval mode, mask=None)."""
    B, S, D = query.shape
    Q = query @ params["wq"] + params["bq"]
    K = key @ params["wk"] + params["bk"]
    V = value @ params["wv"] + params["bv"]

    def split_heads(x):
        return x.reshape(B, S, N_HEADS, HEAD_DIM).transpose(0, 2, 1, 3)  # (B,H,S,Dh)

    Qh, Kh, Vh = split_heads(Q), split_heads(K), split_heads(V)
    score = jnp.einsum("bhqd,bhkd->bhqk", Qh, Kh) / math.sqrt(HEAD_DIM)
    alpha = jax.nn.softmax(score, axis=-1)
    x = jnp.einsum("bhqk,bhkd->bhqd", alpha, Vh)
    x = x.transpose(0, 2, 1, 3).reshape(B, S, D)
    x = x @ params["wo"] + params["bo"]
    return x, alpha


def init_params(key):
    ks = jax.random.split(key, 8)
    bound = 1.0 / math.sqrt(HID_DIM)

    def w(k):
        return jax.random.uniform(k, (HID_DIM, HID_DIM), jnp.float32, -bound, bound)

    def b(k):
        return jax.random.uniform(k, (1, HID_DIM), jnp.float32, -bound, bound)

    return {
        "wq": w(ks[0]), "bq": b(ks[1]),
        "wk": w(ks[2]), "bk": b(ks[3]),
        "wv": w(ks[4]), "bv": b(ks[5]),
        "wo": w(ks[6]), "bo": b(ks[7]),
    }


if __name__ == "__main__":
    root = jax.random.PRNGKey(0)
    k_p, k_q, k_k, k_v = jax.random.split(root, 4)

    params = init_params(k_p)
    query = jax.random.normal(k_q, (BATCH, SEQ, HID_DIM), jnp.float32)
    key_in = jax.random.normal(k_k, (BATCH, SEQ, HID_DIM), jnp.float32)
    value = jax.random.normal(k_v, (BATCH, SEQ, HID_DIM), jnp.float32)

    x_out, alpha_out = multi_head_attention(query, key_in, value, params)
    x_out = jax.block_until_ready(x_out)
    alpha_out = jax.block_until_ready(alpha_out)

    x_ref, alpha_ref = reference_mha(query, key_in, value, params)
    assert jnp.allclose(x_out, x_ref, atol=1e-4, rtol=1e-4), "x mismatch"
    assert jnp.allclose(alpha_out, alpha_ref, atol=1e-5, rtol=1e-5), "alpha mismatch"

    print("KERNEL_OK")
</pallas_src>

<mosaic_0001>
module attributes {stable_mosaic.version = 11 : i64} {
  func.func @mha_kernel(%arg0: memref<48x32xf32, #tpu.memory_space<vmem>>, %arg1: memref<32x96xf32, #tpu.memory_space<vmem>>, %arg2: memref<1x96xf32, #tpu.memory_space<vmem>>, %arg3: memref<32x32xf32, #tpu.memory_space<vmem>>, %arg4: memref<1x32xf32, #tpu.memory_space<vmem>>, %arg5: memref<64x32xf32, #tpu.memory_space<vmem>>, %arg6: memref<64x64xf32, #tpu.memory_space<vmem>>, %arg7: memref<16x32xf32, #tpu.memory_space<vmem>>, %arg8: memref<64x64xf32, #tpu.memory_space<vmem>>) attributes {dimension_semantics = [], scalar_prefetch = 0 : i64, scratch_operands = 0 : i64, tpu.core_type = #tpu.core_type<tc>} {
    %c0 = arith.constant 0 : index
    %c0_0 = arith.constant 0 : index
    %0 = vector.load %arg0[%c0, %c0_0] : memref<48x32xf32, #tpu.memory_space<vmem>>, vector<48x32xf32>
    %c0_1 = arith.constant 0 : index
    %c0_2 = arith.constant 0 : index
    %1 = vector.load %arg1[%c0_1, %c0_2] : memref<32x96xf32, #tpu.memory_space<vmem>>, vector<32x96xf32>
    %cst = arith.constant dense<0.000000e+00> : vector<48x96xf32>
    %2 = tpu.matmul %0, %1, %cst {dimension_numbers = #tpu.dot_dimension_numbers<[1], [0], [0], [1], [0, 0, 1, 1], [], []>} : vector<48x32xf32>, vector<32x96xf32>, vector<48x96xf32> -> vector<48x96xf32>
    %c0_3 = arith.constant 0 : index
    %c0_4 = arith.constant 0 : index
    %3 = vector.load %arg2[%c0_3, %c0_4] : memref<1x96xf32, #tpu.memory_space<vmem>>, vector<1x96xf32>
    %4 = vector.broadcast %3 : vector<1x96xf32> to vector<48x96xf32>
    %5 = arith.addf %2, %4 : vector<48x96xf32>
    %6 = vector.extract_strided_slice %5 {offsets = [0, 0], sizes = [16, 32], strides = [1, 1]} : vector<48x96xf32> to vector<16x32xf32>
    %7 = vector.extract_strided_slice %5 {offsets = [16, 32], sizes = [16, 32], strides = [1, 1]} : vector<48x96xf32> to vector<16x32xf32>
    %8 = vector.extract_strided_slice %5 {offsets = [32, 64], sizes = [16, 32], strides = [1, 1]} : vector<48x96xf32> to vector<16x32xf32>
    %c0_5 = arith.constant 0 : index
    %c0_6 = arith.constant 0 : index
    %9 = vector.load %arg5[%c0_5, %c0_6] : memref<64x32xf32, #tpu.memory_space<vmem>>, vector<64x32xf32>
    %10 = tpu.concatenate %7, %7, %7, %7 in 0 : vector<16x32xf32>, vector<16x32xf32>, vector<16x32xf32>, vector<16x32xf32> -> vector<64x32xf32>
    %11 = arith.mulf %10, %9 : vector<64x32xf32>
    %12 = tpu.concatenate %8, %8, %8, %8 in 0 : vector<16x32xf32>, vector<16x32xf32>, vector<16x32xf32>, vector<16x32xf32> -> vector<64x32xf32>
    %13 = arith.mulf %12, %9 : vector<64x32xf32>
    %cst_7 = arith.constant dense<0.000000e+00> : vector<16x64xf32>
    %14 = tpu.matmul %6, %11, %cst_7 {dimension_numbers = #tpu.dot_dimension_numbers<[1], [1], [0], [0], [0, 0, 1, 0], [], []>} : vector<16x32xf32>, vector<64x32xf32>, vector<16x64xf32> -> vector<16x64xf32>
    %cst_8 = arith.constant 0.353553385 : f32
    %15 = vector.broadcast %cst_8 : f32 to vector<16x64xf32>
    %16 = arith.mulf %14, %15 : vector<16x64xf32>
    %17 = tpu.concatenate %16, %16, %16, %16 in 0 : vector<16x64xf32>, vector<16x64xf32>, vector<16x64xf32>, vector<16x64xf32> -> vector<64x64xf32>
    %c0_9 = arith.constant 0 : index
    %c0_10 = arith.constant 0 : index
    %18 = vector.load %arg6[%c0_9, %c0_10] : memref<64x64xf32, #tpu.memory_space<vmem>>, vector<64x64xf32>
    %19 = arith.addf %17, %18 : vector<64x64xf32>
    %cst_11 = arith.constant dense<0xFF800000> : vector<64xf32>
    %20 = vector.multi_reduction <maximumf>, %19, %cst_11 [1] : vector<64x64xf32> to vector<64xf32>
    %21 = vector.shape_cast %20 : vector<64xf32> to vector<64x1xf32>
    %22 = vector.broadcast %21 : vector<64x1xf32> to vector<64x64xf32>
    %23 = arith.subf %19, %22 : vector<64x64xf32>
    %24 = math.exp %23 : vector<64x64xf32>
    %cst_12 = arith.constant dense<0.000000e+00> : vector<64xf32>
    %25 = vector.multi_reduction <add>, %24, %cst_12 [1] : vector<64x64xf32> to vector<64xf32>
    %26 = vector.shape_cast %25 : vector<64xf32> to vector<64x1xf32>
    %27 = tpu.reciprocal %26 : vector<64x1xf32> -> vector<64x1xf32>
    %28 = vector.broadcast %27 : vector<64x1xf32> to vector<64x64xf32>
    %29 = arith.mulf %24, %28 : vector<64x64xf32>
    %c0_13 = arith.constant 0 : index
    %c0_14 = arith.constant 0 : index
    %30 = vector.load %arg8[%c0_13, %c0_14] : memref<64x64xf32, #tpu.memory_space<vmem>>, vector<64x64xf32>
    tpu.vector_store %arg8[%c0_13, %c0_14], %29 {strides = array<i32>} : memref<64x64xf32, #tpu.memory_space<vmem>>, vector<64x64xf32>,
    %cst_15 = arith.constant dense<0.000000e+00> : vector<64x32xf32>
    %31 = tpu.matmul %29, %13, %cst_15 {dimension_numbers = #tpu.dot_dimension_numbers<[1], [0], [0], [1], [0, 0, 1, 1], [], []>} : vector<64x64xf32>, vector<64x32xf32>, vector<64x32xf32> -> vector<64x32xf32>
    %32 = vector.extract_strided_slice %31 {offsets = [0, 0], sizes = [16, 32], strides = [1, 1]} : vector<64x32xf32> to vector<16x32xf32>
    %33 = vector.extract_strided_slice %31 {offsets = [16, 0], sizes = [16, 32], strides = [1, 1]} : vector<64x32xf32> to vector<16x32xf32>
    %34 = arith.addf %32, %33 : vector<16x32xf32>
    %35 = vector.extract_strided_slice %31 {offsets = [32, 0], sizes = [16, 32], strides = [1, 1]} : vector<64x32xf32> to vector<16x32xf32>
    %36 = arith.addf %34, %35 : vector<16x32xf32>
    %37 = vector.extract_strided_slice %31 {offsets = [48, 0], sizes = [16, 32], strides = [1, 1]} : vector<64x32xf32> to vector<16x32xf32>
    %38 = arith.addf %36, %37 : vector<16x32xf32>
    %c0_16 = arith.constant 0 : index
    %c0_17 = arith.constant 0 : index
    %39 = vector.load %arg3[%c0_16, %c0_17] : memref<32x32xf32, #tpu.memory_space<vmem>>, vector<32x32xf32>
    %cst_18 = arith.constant dense<0.000000e+00> : vector<16x32xf32>
    %40 = tpu.matmul %38, %39, %cst_18 {dimension_numbers = #tpu.dot_dimension_numbers<[1], [0], [0], [1], [0, 0, 1, 1], [], []>} : vector<16x32xf32>, vector<32x32xf32>, vector<16x32xf32> -> vector<16x32xf32>
    %c0_19 = arith.constant 0 : index
    %c0_20 = arith.constant 0 : index
    %41 = vector.load %arg4[%c0_19, %c0_20] : memref<1x32xf32, #tpu.memory_space<vmem>>, vector<1x32xf32>
    %42 = vector.broadcast %41 : vector<1x32xf32> to vector<16x32xf32>
    %43 = arith.addf %40, %42 : vector<16x32xf32>
    %c0_21 = arith.constant 0 : index
    %c0_22 = arith.constant 0 : index
    %44 = vector.load %arg7[%c0_21, %c0_22] : memref<16x32xf32, #tpu.memory_space<vmem>>, vector<16x32xf32>
    tpu.vector_store %arg7[%c0_21, %c0_22], %43 {strides = array<i32>} : memref<16x32xf32, #tpu.memory_space<vmem>>, vector<16x32xf32>,
    return
  }
}

</mosaic_0001>

<llo_original>
// kernel: multi_head_attention.1
$region0: #{multi_head_attention.1}
  #allocation0 [shape = 'u32[]', space=smem, size = 0x4, offset = 0x4, fixed_abs, tag = 'smem constant byte address 0x4 - core index']
  #allocation1 [shape = 'u32[144,128]{1,0:T(1,128)}', space=vmem, size = 0x12000, scoped, tag = 'internal scratch']
  %s0 = inlined_call_operand.vmem [shape: f32[48,32], index: 0, kind: input, shape index: {}]
  %s1 = inlined_call_operand.vmem [shape: f32[32,96], index: 1, kind: input, shape index: {}]
  %s2 = inlined_call_operand.vmem [shape: f32[1,96], index: 2, kind: input, shape index: {}]
  %s3 = inlined_call_operand.vmem [shape: f32[32,32], index: 3, kind: input, shape index: {}]
  %s4 = inlined_call_operand.vmem [shape: f32[1,32], index: 4, kind: input, shape index: {}]
  %s5 = inlined_call_operand.vmem [shape: f32[64,32], index: 5, kind: input, shape index: {}]
  %s6 = inlined_call_operand.vmem [shape: f32[64,64], index: 6, kind: input, shape index: {}]
  %s7 = inlined_call_operand.hbm [shape: f32[16,32], index: 7, kind: output, shape index: {0}]
  %s8 = inlined_call_operand.vmem [shape: f32[64,64], index: 8, kind: output, shape index: {1}]
  %9 = xla_tuple %s7, %s8
  %s10 = sld [smem:[#allocation0]]
  $region46: #{multi_head_attention.1} parent=0
    _
  %s12 = ssub.s32 1, %s10
  %s13 = scalar_select 0, %s12, %s10
  $region1: #{multi_head_attention.1} parent=0
    #allocation2 [shape = 'u8[8192]{0}', space=vmem, size = 0x2000, scoped, tag = 'output window, operand 0, single buffered']
    #allocation3 [shape = 's32[1]{0}', space=sflag, size = 0x4, scoped, tag = 'scoped memory for multi_head_attention.1']
    %14 = vsyncpa [#allocation3], 0
    // Predicated region
    $region2: #{multi_head_attention.1} parent=1 // pred_check
      _
    $region3: #{multi_head_attention.1} parent=1 // pred_check_branch
      %16 = sbr.rel (0) target = $region5
    $region4: #{multi_head_attention.1} parent=1 // pred_region
      _
    $region5: #{multi_head_attention.1} parent=1 // pred_fallthru
      _
    // Predicated region
    $region6: #{multi_head_attention.1} parent=1 // pred_check
      _
    $region7: #{multi_head_attention.1} parent=1 // pred_check_branch
      %18 = sbr.rel (0) target = $region9
    $region8: #{multi_head_attention.1} parent=1 // pred_region
      _
    $region9: #{multi_head_attention.1} parent=1 // pred_fallthru
      _
    // Predicated region
    $region10: #{multi_head_attention.1} parent=1 // pred_check
      _
    $region11: #{multi_head_attention.1} parent=1 // pred_check_branch
      %20 = sbr.rel (0) target = $region13
    $region12: #{multi_head_attention.1} parent=1 // pred_region
      _
    $region13: #{multi_head_attention.1} parent=1 // pred_fallthru
      _
    // Predicated region
    $region14: #{multi_head_attention.1} parent=1 // pred_check
      _
    $region15: #{multi_head_attention.1} parent=1 // pred_check_branch
      %22 = sbr.rel (0) target = $region17
    $region16: #{multi_head_attention.1} parent=1 // pred_region
      _
    $region17: #{multi_head_attention.1} parent=1 // pred_fallthru
      _
    // Predicated region
    $region18: #{multi_head_attention.1} parent=1 // pred_check
      _
    $region19: #{multi_head_attention.1} parent=1 // pred_check_branch
      %24 = sbr.rel (0) target = $region21
    $region20: #{multi_head_attention.1} parent=1 // pred_region
      _
    $region21: #{multi_head_attention.1} parent=1 // pred_fallthru
      _
    // Predicated region
    $region22: #{multi_head_attention.1} parent=1 // pred_check
      _
    $region23: #{multi_head_attention.1} parent=1 // pred_check_branch
      %26 = sbr.rel (0) target = $region25
    $region24: #{multi_head_attention.1} parent=1 // pred_region
      _
    $region25: #{multi_head_attention.1} parent=1 // pred_fallthru
      _
    // Predicated region
    $region26: #{multi_head_attention.1} parent=1 // pred_check
      _
    $region27: #{multi_head_attention.1} parent=1 // pred_check_branch
      %28 = sbr.rel (0) target = $region29
    $region28: #{multi_head_attention.1} parent=1 // pred_region
      _
    $region29: #{multi_head_attention.1} parent=1 // pred_fallthru
      _
    %v29 = vld [vmem:[%s0] sm:$0xff]
    %v30 = vld [vmem:[%s0 + $0x8] sm:$0xff]
    %v31 = vld [vmem:[%s0 + $0x10] sm:$0xff]
    %v32 = vld [vmem:[%s0 + $0x18] sm:$0xff]
    %v33 = vld [vmem:[%s0 + $0x20] sm:$0xff]
    %v34 = vld [vmem:[%s0 + $0x28] sm:$0xff]
    %v35 = vld [vmem:[%s1] sm:$0xff]
    %v36 = vld [vmem:[%s1 + $0x8] sm:$0xff]
    %v37 = vld [vmem:[%s1 + $0x10] sm:$0xff]
    %v38 = vld [vmem:[%s1 + $0x18] sm:$0xff]
    %v39 = vld [vmem:[%s2] sm:$0x1]
    %v41 = vlaneseq
    %v42 = vshrl.u32 %v41, 7
    %v43 = vsub.s32 0, %v42
    %v44 = vrot.slane %v39, %v43
    %vm46 = vcmask 261120
    %v48 = vsel %vm46, %v29, 0
    %v51 = vsel %vm46, %v30, 0
    %v54 = vsel %vm46, %v31, 0
    %v57 = vsel %vm46, %v32, 0
    %v60 = vsel %vm46, %v33, 0
    %v63 = vsel %vm46, %v34, 0
    %65 = vmatprep.subr.mxu0 0.0
    %66 = vmatpush1.msra.mxu0 0.0
    %67 = vmatprep.subr.mxu0 0.0
    %68 = vmatpush1.msra.mxu0 0.0
    %69 = vmatprep.subr.mxu0 0.0
    %70 = vmatpush1.msra.mxu0 0.0
    %71 = vmatprep.subr.mxu0 0.0
    %72 = vmatpush1.msra.mxu0 0.0
    %73 = vmatprep.subr.mxu0 0.0
    %74 = vmatpush1.msra.mxu0 0.0
    %75 = vmatprep.subr.mxu0 0.0
    %76 = vmatpush1.msra.mxu0 0.0
    %77 = vmatprep.subr.mxu0 0.0
    %78 = vmatpush1.msra.mxu0 0.0
    %79 = vmatprep.subr.mxu0 0.0
    %80 = vmatpush1.msra.mxu0 0.0
    %81 = vmatprep.subr.mxu0 0.0
    %82 = vmatpush1.msra.mxu0 0.0
    %83 = vmatprep.subr.mxu0 0.0
    %84 = vmatpush1.msra.mxu0 0.0
    %85 = vmatprep.subr.mxu0 0.0
    %86 = vmatpush1.msra.mxu0 0.0
    %87 = vmatprep.subr.mxu0 0.0
    %88 = vmatpush1.msra.mxu0 0.0
    %89 = vmatprep.subr.mxu0 0.0
    %90 = vmatpush1.msra.mxu0 %v38
    %91 = vmatprep.subr.mxu0 0.0
    %92 = vmatpush1.msra.mxu0 %v37
    %93 = vmatprep.subr.mxu0 0.0
    %94 = vmatpush1.msra.mxu0 %v36
    %95 = vmatprep.subr.mxu0 0.0
    %96 = vmatpush1.msra.mxu0 %v35
    %97 = vmatprep.subr.mxu0 0.0
    %98 = vmatpush2.msra.mxu0 0.0
    %99 = vmatprep.subr.mxu0 0.0
    %100 = vmatpush2.msra.mxu0 0.0
    %101 = vmatprep.subr.mxu0 0.0
    %102 = vmatpush2.msra.mxu0 0.0
    %103 = vmatprep.subr.mxu0 0.0
    %104 = vmatpush2.msra.mxu0 0.0
    %105 = vmatprep.subr.mxu0 0.0
    %106 = vmatpush2.msra.mxu0 0.0
    %107 = vmatprep.subr.mxu0 0.0
    %108 = vmatpush2.msra.mxu0 0.0
    %109 = vmatprep.subr.mxu0 0.0
    %110 = vmatpush2.msra.mxu0 0.0
    %111 = vmatprep.subr.mxu0 0.0
    %112 = vmatpush2.msra.mxu0 0.0
    %113 = vmatprep.subr.mxu0 0.0
    %114 = vmatpush2.msra.mxu0 0.0
    %115 = vmatprep.subr.mxu0 0.0
    %116 = vmatpush2.msra.mxu0 0.0
    %117 = vmatprep.subr.mxu0 0.0
    %118 = vmatpush2.msra.mxu0 0.0
    %119 = vmatprep.subr.mxu0 0.0
    %120 = vmatpush2.msra.mxu0 0.0
    %121 = vmatprep.subr.mxu0 0.0
    %122 = vmatpush2.msra.mxu0 0.0
    %123 = vmatprep.subr.mxu0 0.0
    %124 = vmatpush2.msra.mxu0 0.0
    %125 = vmatprep.subr.mxu0 0.0
    %126 = vmatpush2.msra.mxu0 0.0
    %127 = vmatprep.subr.mxu0 0.0
    %128 = vmatpush2.msra.mxu0 0.0
    %129 = vmatprep.mubr.f32.mxu0 0.0
    %130 = vmatmul.mubr.f32.gmra.mxu0 %v48
    %v131 = vpop.f32.mrf.mxu0
    %v132 = vadd.f32 %v44, %v131
    %v133 = vpop.f32.mrf.mxu0
    %134 = vmatprep.mubr.f32.mxu0 0.0
    %135 = vmatmul.mubr.f32.gmra.mxu0 %v51
    %v136 = vpop.f32.mrf.mxu0
    %v137 = vadd.f32 %v44, %v136
    %v138 = vpop.f32.mrf.mxu0
    %139 = vmatprep.mubr.f32.mxu0 0.0
    %140 = vmatmul.mubr.f32.gmra.mxu0 %v54
    %v141 = vpop.f32.mrf.mxu0
    %v142 = vadd.f32 %v44, %v141
    %v143 = vpop.f32.mrf.mxu0
    %144 = vmatprep.mubr.f32.mxu0 0.0
    %145 = vmatmul.mubr.f32.gmra.mxu0 %v57
    %v146 = vpop.f32.mrf.mxu0
    %v147 = vadd.f32 %v44, %v146
    %v148 = vpop.f32.mrf.mxu0
    %149 = vmatprep.mubr.f32.mxu0 0.0
    %150 = vmatmul.mubr.f32.gmra.mxu0 %v60
    %v151 = vpop.f32.mrf.mxu0
    %v152 = vadd.f32 %v44, %v151
    %v153 = vpop.f32.mrf.mxu0
    %154 = vmatprep.mubr.f32.mxu0 0.0
    %155 = vmatmul.mubr.f32.gmra.mxu0 %v63
    %v156 = vpop.f32.mrf.mxu0
    %v157 = vadd.f32 %v44, %v156
    %v158 = vpop.f32.mrf.mxu0
    %159 = vdwg.mxu0
    %v160 = vld [vmem:[%s5] sm:$0xff]
    %v161 = vld [vmem:[%s5 + $0x8] sm:$0xff]
    %v162 = vld [vmem:[%s5 + $0x10] sm:$0xff]
    %v163 = vld [vmem:[%s5 + $0x18] sm:$0xff]
    %v164 = vld [vmem:[%s5 + $0x20] sm:$0xff]
    %v165 = vld [vmem:[%s5 + $0x28] sm:$0xff]
    %v166 = vld [vmem:[%s5 + $0x30] sm:$0xff]
    %v167 = vld [vmem:[%s5 + $0x38] sm:$0xff]
    %176 = vrot.lane.b32.xlu0 %v160, 32
    %v177 = vpop.permute.xlu0 %176
    %178 = vrot.lane.b32.xlu0 %v161, 32
    %v179 = vpop.permute.xlu0 %178
    %180 = vrot.lane.b32.xlu0 %v162, 32
    %v181 = vpop.permute.xlu0 %180
    %182 = vrot.lane.b32.xlu0 %v163, 32
    %v183 = vpop.permute.xlu0 %182
    %184 = vrot.lane.b32.xlu0 %v164, 32
    %v185 = vpop.permute.xlu0 %184
    %186 = vrot.lane.b32.xlu0 %v165, 32
    %v187 = vpop.permute.xlu0 %186
    %188 = vrot.lane.b32.xlu0 %v166, 32
    %v189 = vpop.permute.xlu0 %188
    %190 = vrot.lane.b32.xlu0 %v167, 32
    %v191 = vpop.permute.xlu0 %190
    %v200 = vmul.f32 %v142, %v177
    %v201 = vmul.f32 %v147, %v179
    %v202 = vmul.f32 %v142, %v181
    %v203 = vmul.f32 %v147, %v183
    %v204 = vmul.f32 %v142, %v185
    %v205 = vmul.f32 %v147, %v187
    %v206 = vmul.f32 %v142, %v189
    %v207 = vmul.f32 %v147, %v191
    %208 = vrot.lane.b32.xlu0 %v160, 64
    %v209 = vpop.permute.xlu0 %208
    %210 = vrot.lane.b32.xlu0 %v161, 64
    %v211 = vpop.permute.xlu0 %210
    %212 = vrot.lane.b32.xlu0 %v162, 64
    %v213 = vpop.permute.xlu0 %212
    %214 = vrot.lane.b32.xlu0 %v163, 64
    %v215 = vpop.permute.xlu0 %214
    %216 = vrot.lane.b32.xlu0 %v164, 64
    %v217 = vpop.permute.xlu0 %216
    %218 = vrot.lane.b32.xlu0 %v165, 64
    %v219 = vpop.permute.xlu0 %218
    %220 = vrot.lane.b32.xlu0 %v166, 64
    %v221 = vpop.permute.xlu0 %220
    %222 = vrot.lane.b32.xlu0 %v167, 64
    %v223 = vpop.permute.xlu0 %222
    %v232 = vmul.f32 %v152, %v209
    %v233 = vmul.f32 %v157, %v211
    %v234 = vmul.f32 %v152, %v213
    %v235 = vmul.f32 %v157, %v215
    %v236 = vmul.f32 %v152, %v217
    %v237 = vmul.f32 %v157, %v219
    %v238 = vmul.f32 %v152, %v221
    %v239 = vmul.f32 %v157, %v223
    %248 = vrot.lane.b32.xlu0 %v200, 96
    %v249 = vpop.permute.xlu0 %248
    %250 = vrot.lane.b32.xlu0 %v201, 96
    %v251 = vpop.permute.xlu0 %250
    %252 = vrot.lane.b32.xlu0 %v202, 96
    %v253 = vpop.permute.xlu0 %252
    %254 = vrot.lane.b32.xlu0 %v203, 96
    %v255 = vpop.permute.xlu0 %254
    %256 = vrot.lane.b32.xlu0 %v204, 96
    %v257 = vpop.permute.xlu0 %256
    %258 = vrot.lane.b32.xlu0 %v205, 96
    %v259 = vpop.permute.xlu0 %258
    %260 = vrot.lane.b32.xlu0 %v206, 96
    %v261 = vpop.permute.xlu0 %260
    %262 = vrot.lane.b32.xlu0 %v207, 96
    %v263 = vpop.permute.xlu0 %262
    %v265 = vsel %vm46, %v132, 0
    %v268 = vsel %vm46, %v137, 0
    %v270 = vsel %vm46, %v249, 0
    %v272 = vsel %vm46, %v251, 0
    %v274 = vsel %vm46, %v253, 0
    %v276 = vsel %vm46, %v255, 0
    %v278 = vsel %vm46, %v257, 0
    %v280 = vsel %vm46, %v259, 0
    %v282 = vsel %vm46, %v261, 0
    %v284 = vsel %vm46, %v263, 0
    %286 = vmatprep.subr.mxu0 0.0
    %287 = vmatpush1.xpose.msra.mxu0 0.0
    %288 = vmatprep.subr.mxu0 0.0
    %289 = vmatpush1.xpose.msra.mxu0 0.0
    %290 = vmatprep.subr.mxu0 0.0
    %291 = vmatpush1.xpose.msra.mxu0 0.0
    %292 = vmatprep.subr.mxu0 0.0
    %293 = vmatpush1.xpose.msra.mxu0 0.0
    %294 = vmatprep.subr.mxu0 0.0
    %295 = vmatpush1.xpose.msra.mxu0 0.0
    %296 = vmatprep.subr.mxu0 0.0
    %297 = vmatpush1.xpose.msra.mxu0 0.0
    %298 = vmatprep.subr.mxu0 0.0
    %299 = vmatpush1.xpose.msra.mxu0 0.0
    %300 = vmatprep.subr.mxu0 0.0
    %301 = vmatpush1.xpose.msra.mxu0 0.0
    %302 = vmatprep.subr.mxu0 0.0
    %303 = vmatpush1.xpose.msra.mxu0 %v284
    %304 = vmatprep.subr.mxu0 0.0
    %305 = vmatpush1.xpose.msra.mxu0 %v282
    %306 = vmatprep.subr.mxu0 0.0
    %307 = vmatpush1.xpose.msra.mxu0 %v280
    %308 = vmatprep.subr.mxu0 0.0
    %309 = vmatpush1.xpose.msra.mxu0 %v278
    %310 = vmatprep.subr.mxu0 0.0
    %311 = vmatpush1.xpose.msra.mxu0 %v276
    %312 = vmatprep.subr.mxu0 0.0
    %313 = vmatpush1.xpose.msra.mxu0 %v274
    %314 = vmatprep.subr.mxu0 0.0
    %315 = vmatpush1.xpose.msra.mxu0 %v272
    %316 = vmatprep.subr.mxu0 0.0
    %317 = vmatpush1.xpose.msra.mxu0 %v270
    %318 = vmatprep.subr.mxu0 0.0
    %319 = vmatpush2.xpose.msra.mxu0 0.0
    %320 = vmatprep.subr.mxu0 0.0
    %321 = vmatpush2.xpose.msra.mxu0 0.0
    %322 = vmatprep.subr.mxu0 0.0
    %323 = vmatpush2.xpose.msra.mxu0 0.0
    %324 = vmatprep.subr.mxu0 0.0
    %325 = vmatpush2.xpose.msra.mxu0 0.0
    %326 = vmatprep.subr.mxu0 0.0
    %327 = vmatpush2.xpose.msra.mxu0 0.0
    %328 = vmatprep.subr.mxu0 0.0
    %329 = vmatpush2.xpose.msra.mxu0 0.0
    %330 = vmatprep.subr.mxu0 0.0
    %331 = vmatpush2.xpose.msra.mxu0 0.0
    %332 = vmatprep.subr.mxu0 0.0
    %333 = vmatpush2.xpose.msra.mxu0 0.0
    %334 = vmatprep.subr.mxu0 0.0
    %335 = vmatpush2.xpose.msra.mxu0 0.0
    %336 = vmatprep.subr.mxu0 0.0
    %337 = vmatpush2.xpose.msra.mxu0 0.0
    %338 = vmatprep.subr.mxu0 0.0
    %339 = vmatpush2.xpose.msra.mxu0 0.0
    %340 = vmatprep.subr.mxu0 0.0
    %341 = vmatpush2.xpose.msra.mxu0 0.0
    %342 = vmatprep.subr.mxu0 0.0
    %343 = vmatpush2.xpose.msra.mxu0 0.0
    %344 = vmatprep.subr.mxu0 0.0
    %345 = vmatpush2.xpose.msra.mxu0 0.0
    %346 = vmatprep.subr.mxu0 0.0
    %347 = vmatpush2.xpose.msra.mxu0 0.0
    %348 = vmatprep.subr.mxu0 0.0
    %349 = vmatpush2.xpose.msra.mxu0 0.0
    %350 = vmatprep.mubr.f32.mxu0 0.0
    %351 = vmatmul.mubr.f32.gmra.mxu0 %v265
    %v352 = vpop.f32.mrf.mxu0
    %v353 = vadd.f32 0.0, %v352
    %v354 = vpop.f32.mrf.mxu0
    %355 = vmatprep.mubr.f32.mxu0 0.0
    %356 = vmatmul.mubr.f32.gmra.mxu0 %v268
    %v357 = vpop.f32.mrf.mxu0
    %v358 = vadd.f32 0.0, %v357
    %v359 = vpop.f32.mrf.mxu0
    %360 = vdwg.mxu0
    %v361 = vmul.f32 %v353, 0.35355338
    %v362 = vmul.f32 %v358, 0.35355338
    %v363 = vld [vmem:[%s6] sm:$0xff]
    %v364 = vld [vmem:[%s6 + $0x8] sm:$0xff]
    %v365 = vld [vmem:[%s6 + $0x10] sm:$0xff]
    %v366 = vld [vmem:[%s6 + $0x18] sm:$0xff]
    %v367 = vld [vmem:[%s6 + $0x20] sm:$0xff]
    %v368 = vld [vmem:[%s6 + $0x28] sm:$0xff]
    %v369 = vld [vmem:[%s6 + $0x30] sm:$0xff]
    %v370 = vld [vmem:[%s6 + $0x38] sm:$0xff]
    %v371 = vadd.f32 %v361, %v363
    %v372 = vadd.f32 %v362, %v364
    %v373 = vadd.f32 %v361, %v365
    %v374 = vadd.f32 %v362, %v366
    %v375 = vadd.f32 %v361, %v367
    %v376 = vadd.f32 %v362, %v368
    %v377 = vadd.f32 %v361, %v369
    %v378 = vadd.f32 %v362, %v370
    %vm379 = vcmask 523264
    %v380 = vsel %vm379, %v371, -inf
    %381 = vmax.xlane.f32.xlu0 %v380
    %v382 = vpop.xlane.xlu0 %381
    %v383 = vsel %vm379, %v372, -inf
    %384 = vmax.xlane.f32.xlu0 %v383
    %v385 = vpop.xlane.xlu0 %384
    %v386 = vsel %vm379, %v373, -inf
    %387 = vmax.xlane.f32.xlu0 %v386
    %v388 = vpop.xlane.xlu0 %387
    %v389 = vsel %vm379, %v374, -inf
    %390 = vmax.xlane.f32.xlu0 %v389
    %v391 = vpop.xlane.xlu0 %390
    %v392 = vsel %vm379, %v375, -inf
    %393 = vmax.xlane.f32.xlu0 %v392
    %v394 = vpop.xlane.xlu0 %393
    %v395 = vsel %vm379, %v376, -inf
    %396 = vmax.xlane.f32.xlu0 %v395
    %v397 = vpop.xlane.xlu0 %396
    %v398 = vsel %vm379, %v377, -inf
    %399 = vmax.xlane.f32.xlu0 %v398
    %v400 = vpop.xlane.xlu0 %399
    %v401 = vsel %vm379, %v378, -inf
    %402 = vmax.xlane.f32.xlu0 %v401
    %v403 = vpop.xlane.xlu0 %402
    %v404 = vsub.f32 %v371, %v382
    %v405 = vsub.f32 %v372, %v385
    %v406 = vsub.f32 %v373, %v388
    %v407 = vsub.f32 %v374, %v391
    %v408 = vsub.f32 %v375, %v394
    %v409 = vsub.f32 %v376, %v397
    %v410 = vsub.f32 %v377, %v400
    %v411 = vsub.f32 %v378, %v403
    %v412 = vmul.f32 %v404, 1.442695
    %v413 = vpow.pop %v412
    %v414 = vmul.f32 %v405, 1.442695
    %v415 = vpow.pop %v414
    %v416 = vmul.f32 %v406, 1.442695
    %v417 = vpow.pop %v416
    %v418 = vmul.f32 %v407, 1.442695
    %v419 = vpow.pop %v418
    %v420 = vmul.f32 %v408, 1.442695
    %v421 = vpow.pop %v420
    %v422 = vmul.f32 %v409, 1.442695
    %v423 = vpow.pop %v422
    %v424 = vmul.f32 %v410, 1.442695
    %v425 = vpow.pop %v424
    %v426 = vmul.f32 %v411, 1.442695
    %v427 = vpow.pop %v426
    %v428 = vsel %vm379, %v413, 0.0
    %429 = vadd.xlane.f32.xlu0 %v428
    %v430 = vpop.xlane.xlu0 %429
    %v431 = vsel %vm379, %v415, 0.0
    %432 = vadd.xlane.f32.xlu0 %v431
    %v433 = vpop.xlane.xlu0 %432
    %v434 = vsel %vm379, %v417, 0.0
    %435 = vadd.xlane.f32.xlu0 %v434
    %v436 = vpop.xlane.xlu0 %435
    %v437 = vsel %vm379, %v419, 0.0
    %438 = vadd.xlane.f32.xlu0 %v437
    %v439 = vpop.xlane.xlu0 %438
    %v440 = vsel %vm379, %v421, 0.0
    %441 = vadd.xlane.f32.xlu0 %v440
    %v442 = vpop.xlane.xlu0 %441
    %v443 = vsel %vm379, %v423, 0.0
    %444 = vadd.xlane.f32.xlu0 %v443
    %v445 = vpop.xlane.xlu0 %444
    %v446 = vsel %vm379, %v425, 0.0
    %447 = vadd.xlane.f32.xlu0 %v446
    %v448 = vpop.xlane.xlu0 %447
    %v449 = vsel %vm379, %v427, 0.0
    %450 = vadd.xlane.f32.xlu0 %v449
    %v451 = vpop.xlane.xlu0 %450
    %v452 = vrcp.pop %v430
    %v453 = vrcp.pop %v433
    %v454 = vrcp.pop %v436
    %v455 = vrcp.pop %v439
    %v456 = vrcp.pop %v442
    %v457 = vrcp.pop %v445
    %v458 = vrcp.pop %v448
    %v459 = vrcp.pop %v451
    %v460 = vmul.f32 %v413, %v452
    %v461 = vmul.f32 %v415, %v453
    %v462 = vmul.f32 %v417, %v454
    %v463 = vmul.f32 %v419, %v455
    %v464 = vmul.f32 %v421, %v456
    %v465 = vmul.f32 %v423, %v457
    %v466 = vmul.f32 %v425, %v458
    %v467 = vmul.f32 %v427, %v459
    %468 = vst.msk [vmem:[%s8] sm:$0xff] %vm379, %v460
    %469 = vst.msk [vmem:[%s8 + $0x8] sm:$0xff] %vm379, %v461
    %470 = vst.msk [vmem:[%s8 + $0x10] sm:$0xff] %vm379, %v462
    %471 = vst.msk [vmem:[%s8 + $0x18] sm:$0xff] %vm379, %v463
    %472 = vst.msk [vmem:[%s8 + $0x20] sm:$0xff] %vm379, %v464
    %473 = vst.msk [vmem:[%s8 + $0x28] sm:$0xff] %vm379, %v465
    %474 = vst.msk [vmem:[%s8 + $0x30] sm:$0xff] %vm379, %v466
    %475 = vst.msk [vmem:[%s8 + $0x38] sm:$0xff] %vm379, %v467
    %484 = vrot.lane.b32.xlu0 %v232, 64
    %v485 = vpop.permute.xlu0 %484
    %486 = vrot.lane.b32.xlu0 %v233, 64
    %v487 = vpop.permute.xlu0 %486
    %488 = vrot.lane.b32.xlu0 %v234, 64
    %v489 = vpop.permute.xlu0 %488
    %490 = vrot.lane.b32.xlu0 %v235, 64
    %v491 = vpop.permute.xlu0 %490
    %492 = vrot.lane.b32.xlu0 %v236, 64
    %v493 = vpop.permute.xlu0 %492
    %494 = vrot.lane.b32.xlu0 %v237, 64
    %v495 = vpop.permute.xlu0 %494
    %496 = vrot.lane.b32.xlu0 %v238, 64
    %v497 = vpop.permute.xlu0 %496
    %498 = vrot.lane.b32.xlu0 %v239, 64
    %v499 = vpop.permute.xlu0 %498
    %v509 = vsel %vm379, %v460, 0
    %v512 = vsel %vm379, %v461, 0
    %v515 = vsel %vm379, %v462, 0
    %v518 = vsel %vm379, %v463, 0
    %v521 = vsel %vm379, %v464, 0
    %v524 = vsel %vm379, %v465, 0
    %v527 = vsel %vm379, %v466, 0
    %v530 = vsel %vm379, %v467, 0
    %532 = vmatprep.subr.mxu0 0.0
    %533 = vmatpush1.msra.mxu0 0.0
    %534 = vmatprep.subr.mxu0 0.0
    %535 = vmatpush1.msra.mxu0 0.0
    %536 = vmatprep.subr.mxu0 0.0
    %537 = vmatpush1.msra.mxu0 0.0
    %538 = vmatprep.subr.mxu0 0.0
    %539 = vmatpush1.msra.mxu0 0.0
    %540 = vmatprep.subr.mxu0 0.0
    %541 = vmatpush1.msra.mxu0 0.0
    %542 = vmatprep.subr.mxu0 0.0
    %543 = vmatpush1.msra.mxu0 0.0
    %544 = vmatprep.subr.mxu0 0.0
    %545 = vmatpush1.msra.mxu0 0.0
    %546 = vmatprep.subr.mxu0 0.0
    %547 = vmatpush1.msra.mxu0 0.0
    %548 = vmatprep.subr.mxu0 0.0
    %549 = vmatpush1.msra.mxu0 %v499
    %550 = vmatprep.subr.mxu0 0.0
    %551 = vmatpush1.msra.mxu0 %v497
    %552 = vmatprep.subr.mxu0 0.0
    %553 = vmatpush1.msra.mxu0 %v495
    %554 = vmatprep.subr.mxu0 0.0
    %555 = vmatpush1.msra.mxu0 %v493
    %556 = vmatprep.subr.mxu0 0.0
    %557 = vmatpush1.msra.mxu0 %v491
    %558 = vmatprep.subr.mxu0 0.0
    %559 = vmatpush1.msra.mxu0 %v489
    %560 = vmatprep.subr.mxu0 0.0
    %561 = vmatpush1.msra.mxu0 %v487
    %562 = vmatprep.subr.mxu0 0.0
    %563 = vmatpush1.msra.mxu0 %v485
    %564 = vmatprep.subr.mxu0 0.0
    %565 = vmatpush2.msra.mxu0 0.0
    %566 = vmatprep.subr.mxu0 0.0
    %567 = vmatpush2.msra.mxu0 0.0
    %568 = vmatprep.subr.mxu0 0.0
    %569 = vmatpush2.msra.mxu0 0.0
    %570 = vmatprep.subr.mxu0 0.0
    %571 = vmatpush2.msra.mxu0 0.0
    %572 = vmatprep.subr.mxu0 0.0
    %573 = vmatpush2.msra.mxu0 0.0
    %574 = vmatprep.subr.mxu0 0.0
    %575 = vmatpush2.msra.mxu0 0.0
    %576 = vmatprep.subr.mxu0 0.0
    %577 = vmatpush2.msra.mxu0 0.0
    %578 = vmatprep.subr.mxu0 0.0
    %579 = vmatpush2.msra.mxu0 0.0
    %580 = vmatprep.subr.mxu0 0.0
    %581 = vmatpush2.msra.mxu0 0.0
    %582 = vmatprep.subr.mxu0 0.0
    %583 = vmatpush2.msra.mxu0 0.0
    %584 = vmatprep.subr.mxu0 0.0
    %585 = vmatpush2.msra.mxu0 0.0
    %586 = vmatprep.subr.mxu0 0.0
    %587 = vmatpush2.msra.mxu0 0.0
    %588 = vmatprep.subr.mxu0 0.0
    %589 = vmatpush2.msra.mxu0 0.0
    %590 = vmatprep.subr.mxu0 0.0
    %591 = vmatpush2.msra.mxu0 0.0
    %592 = vmatprep.subr.mxu0 0.0
    %593 = vmatpush2.msra.mxu0 0.0
    %594 = vmatprep.subr.mxu0 0.0
    %595 = vmatpush2.msra.mxu0 0.0
    %596 = vmatprep.mubr.f32.mxu0 0.0
    %597 = vmatmul.mubr.f32.gmra.mxu0 %v509
    %v598 = vpop.f32.mrf.mxu0
    %v599 = vadd.f32 0.0, %v598
    %v600 = vpop.f32.mrf.mxu0
    %601 = vmatprep.mubr.f32.mxu0 0.0
    %602 = vmatmul.mubr.f32.gmra.mxu0 %v512
    %v603 = vpop.f32.mrf.mxu0
    %v604 = vadd.f32 0.0, %v603
    %v605 = vpop.f32.mrf.mxu0
    %606 = vmatprep.mubr.f32.mxu0 0.0
    %607 = vmatmul.mubr.f32.gmra.mxu0 %v515
    %v608 = vpop.f32.mrf.mxu0
    %v609 = vadd.f32 0.0, %v608
    %v610 = vpop.f32.mrf.mxu0
    %611 = vmatprep.mubr.f32.mxu0 0.0
    %612 = vmatmul.mubr.f32.gmra.mxu0 %v518
    %v613 = vpop.f32.mrf.mxu0
    %v614 = vadd.f32 0.0, %v613
    %v615 = vpop.f32.mrf.mxu0
    %616 = vmatprep.mubr.f32.mxu0 0.0
    %617 = vmatmul.mubr.f32.gmra.mxu0 %v521
    %v618 = vpop.f32.mrf.mxu0
    %v619 = vadd.f32 0.0, %v618
    %v620 = vpop.f32.mrf.mxu0
    %621 = vmatprep.mubr.f32.mxu0 0.0
    %622 = vmatmul.mubr.f32.gmra.mxu0 %v524
    %v623 = vpop.f32.mrf.mxu0
    %v624 = vadd.f32 0.0, %v623
    %v625 = vpop.f32.mrf.mxu0
    %626 = vmatprep.mubr.f32.mxu0 0.0
    %627 = vmatmul.mubr.f32.gmra.mxu0 %v527
    %v628 = vpop.f32.mrf.mxu0
    %v629 = vadd.f32 0.0, %v628
    %v630 = vpop.f32.mrf.mxu0
    %631 = vmatprep.mubr.f32.mxu0 0.0
    %632 = vmatmul.mubr.f32.gmra.mxu0 %v530
    %v633 = vpop.f32.mrf.mxu0
    %v634 = vadd.f32 0.0, %v633
    %v635 = vpop.f32.mrf.mxu0
    %636 = vdwg.mxu0
    %v637 = vadd.f32 %v599, %v609
    %v638 = vadd.f32 %v604, %v614
    %v639 = vadd.f32 %v637, %v619
    %v640 = vadd.f32 %v638, %v624
    %v641 = vadd.f32 %v639, %v629
    %v642 = vadd.f32 %v640, %v634
    %v643 = vld [vmem:[%s3] sm:$0xff]
    %v644 = vld [vmem:[%s3 + $0x8] sm:$0xff]
    %v645 = vld [vmem:[%s3 + $0x10] sm:$0xff]
    %v646 = vld [vmem:[%s3 + $0x18] sm:$0xff]
    %v647 = vld [vmem:[%s4] sm:$0x1]
    %v649 = vlaneseq
    %v650 = vshrl.u32 %v649, 7
    %v651 = vsub.s32 0, %v650
    %v652 = vrot.slane %v647, %v651
    %v655 = vsel %vm46, %v641, 0
    %v658 = vsel %vm46, %v642, 0
    %660 = vmatprep.subr.mxu0 0.0
    %661 = vmatpush1.msra.mxu0 0.0
    %662 = vmatprep.subr.mxu0 0.0
    %663 = vmatpush1.msra.mxu0 0.0
    %664 = vmatprep.subr.mxu0 0.0
    %665 = vmatpush1.msra.mxu0 0.0
    %666 = vmatprep.subr.mxu0 0.0
    %667 = vmatpush1.msra.mxu0 0.0
    %668 = vmatprep.subr.mxu0 0.0
    %669 = vmatpush1.msra.mxu0 0.0
    %670 = vmatprep.subr.mxu0 0.0
    %671 = vmatpush1.msra.mxu0 0.0
    %672 = vmatprep.subr.mxu0 0.0
    %673 = vmatpush1.msra.mxu0 0.0
    %674 = vmatprep.subr.mxu0 0.0
    %675 = vmatpush1.msra.mxu0 0.0
    %676 = vmatprep.subr.mxu0 0.0
    %677 = vmatpush1.msra.mxu0 0.0
    %678 = vmatprep.subr.mxu0 0.0
    %679 = vmatpush1.msra.mxu0 0.0
    %680 = vmatprep.subr.mxu0 0.0
    %681 = vmatpush1.msra.mxu0 0.0
    %682 = vmatprep.subr.mxu0 0.0
    %683 = vmatpush1.msra.mxu0 0.0
    %684 = vmatprep.subr.mxu0 0.0
    %685 = vmatpush1.msra.mxu0 %v646
    %686 = vmatprep.subr.mxu0 0.0
    %687 = vmatpush1.msra.mxu0 %v645
    %688 = vmatprep.subr.mxu0 0.0
    %689 = vmatpush1.msra.mxu0 %v644
    %690 = vmatprep.subr.mxu0 0.0
    %691 = vmatpush1.msra.mxu0 %v643
    %692 = vmatprep.subr.mxu0 0.0
    %693 = vmatpush2.msra.mxu0 0.0
    %694 = vmatprep.subr.mxu0 0.0
    %695 = vmatpush2.msra.mxu0 0.0
    %696 = vmatprep.subr.mxu0 0.0
    %697 = vmatpush2.msra.mxu0 0.0
    %698 = vmatprep.subr.mxu0 0.0
    %699 = vmatpush2.msra.mxu0 0.0
    %700 = vmatprep.subr.mxu0 0.0
    %701 = vmatpush2.msra.mxu0 0.0
    %702 = vmatprep.subr.mxu0 0.0
    %703 = vmatpush2.msra.mxu0 0.0
    %704 = vmatprep.subr.mxu0 0.0
    %705 = vmatpush2.msra.mxu0 0.0
    %706 = vmatprep.subr.mxu0 0.0
    %707 = vmatpush2.msra.mxu0 0.0
    %708 = vmatprep.subr.mxu0 0.0
    %709 = vmatpush2.msra.mxu0 0.0
    %710 = vmatprep.subr.mxu0 0.0
    %711 = vmatpush2.msra.mxu0 0.0
    %712 = vmatprep.subr.mxu0 0.0
    %713 = vmatpush2.msra.mxu0 0.0
    %714 = vmatprep.subr.mxu0 0.0
    %715 = vmatpush2.msra.mxu0 0.0
    %716 = vmatprep.subr.mxu0 0.0
    %717 = vmatpush2.msra.mxu0 0.0
    %718 = vmatprep.subr.mxu0 0.0
    %719 = vmatpush2.msra.mxu0 0.0
    %720 = vmatprep.subr.mxu0 0.0
    %721 = vmatpush2.msra.mxu0 0.0
    %722 = vmatprep.subr.mxu0 0.0
    %723 = vmatpush2.msra.mxu0 0.0
    %724 = vmatprep.mubr.f32.mxu0 0.0
    %725 = vmatmul.mubr.f32.gmra.mxu0 %v655
    %v726 = vpop.f32.mrf.mxu0
    %v727 = vadd.f32 %v652, %v726
    %v728 = vpop.f32.mrf.mxu0
    %729 = vmatprep.mubr.f32.mxu0 0.0
    %730 = vmatmul.mubr.f32.gmra.mxu0 %v658
    %v731 = vpop.f32.mrf.mxu0
    %v732 = vadd.f32 %v652, %v731
    %v733 = vpop.f32.mrf.mxu0
    %734 = vdwg.mxu0
    %735 = vst.msk [vmem:[#allocation2] sm:$0xff] %vm46, %v727
    %736 = vst.msk [vmem:[#allocation2 + $0x8] sm:$0xff] %vm46, %v732
    // Predicated region
    $region30: #{multi_head_attention.1} parent=1 // pred_check
      _
    $region31: #{multi_head_attention.1} parent=1 // pred_check_branch
      %738 = sbr.rel (0) target = $region33
    $region32: #{multi_head_attention.1} parent=1 // pred_region
      %s740 = ssub.s32 256, 256
      %741 = vsyncadd [#allocation3], %s740
      %s742 = sshll.u32 [#allocation2], 4
      %s743 = int_to_ptr.vmem [resolvable:$true] %s742
      %748 = dma.vmem_to_hbm [thread:$0]  %s743, 256, %s7, [#allocation3], 128, 128, 8
    $region33: #{multi_head_attention.1} parent=1 // pred_fallthru
      _
    // Predicated region
    $region34: #{multi_head_attention.1} parent=1 // pred_check
      _
    $region35: #{multi_head_attention.1} parent=1 // pred_check_branch
      %750 = sbr.rel (0) target = $region37
    $region36: #{multi_head_attention.1} parent=1 // pred_region
      _
    $region37: #{multi_head_attention.1} parent=1 // pred_fallthru
      _
    // Predicated region
    $region38: #{multi_head_attention.1} parent=1 // pred_check
      _
    $region39: #{multi_head_attention.1} parent=1 // pred_check_branch
      %752 = sbr.rel (0) target = $region41
    $region40: #{multi_head_attention.1} parent=1 // pred_region
      %753 = dma.done [#allocation3], 256
    $region41: #{multi_head_attention.1} parent=1 // pred_fallthru
      _
    // Predicated region
    $region42: #{multi_head_attention.1} parent=1 // pred_check
      _
    $region43: #{multi_head_attention.1} parent=1 // pred_check_branch
      %755 = sbr.rel (0) target = $region45
    $region44: #{multi_head_attention.1} parent=1 // pred_region
      _
    $region45: #{multi_head_attention.1} parent=1 // pred_fallthru
      _
    %756 = vsyncpa [#allocation3], 1

</llo_original>
